<compile_context>
chip_gen: v7x
topology: tpu7x:2x2x1
jax: 0.10.0
libtpu: 0.0.40
codegen_flags: <defaults>
</compile_context>

<pallas_src>
import jax
import jax.numpy as jnp
from jax.experimental import pallas as pl
from jax.experimental.pallas import tpu as pltpu


def _bpr_partial_kernel(pos_ref, neg_ref, mask_ref, loss_ref, msum_ref):
    """One (B-block, N-block) grid step: accumulate partial masked logsigmoid sums."""
    ni = pl.program_id(1)

    pos = pos_ref[...].astype(jnp.float32)    # (TB, P)
    neg = neg_ref[...].astype(jnp.float32)    # (TB, TN)
    mask = mask_ref[...].astype(jnp.float32)  # (TB, P)

    @pl.when(ni == 0)
    def _init():
        # Zero the resident per-B-block loss accumulator and record this
        # B-block's mask sum once (not once per N step).
        loss_ref[...] = jnp.zeros_like(loss_ref)
        msum_ref[...] = jnp.zeros_like(msum_ref) + jnp.sum(mask)

    # Pairwise delta + numerically stable logsigmoid (EUP: exp + log1p).
    logits = pos[:, :, None] - neg[:, None, :]                         # (TB, P, TN)
    log_sig = jnp.minimum(logits, 0.0) - jnp.log1p(jnp.exp(-jnp.abs(logits)))

    # Lane-axis (N) reduce first, then a single mask multiply per (b, i).
    row_sum = jnp.sum(log_sig, axis=-1)                                # (TB, P)
    loss_ref[...] += jnp.sum(row_sum * mask)                           # scalar broadcast


def _pick_tile(dim, target, align):
    """Largest t <= target dividing `dim` that is a multiple of `align`
    (satisfies the TPU (8, 128) block constraint); falls back to the full dim."""
    if dim <= target:
        return dim
    for t in range(min(target, dim), 0, -1):
        if dim % t == 0 and t % align == 0:
            return t
    return dim


def bpr_loss(pos_preds, neg_preds, pos_mask):
    B, P = pos_preds.shape
    _, N = neg_preds.shape

    # TB along batch (multiple of 8 sublanes), TN along negatives (multiple of
    # 128 lanes).  Target ~256K f32 elements of pairwise work per grid step:
    # the kernel is EUP/overhead bound, so big steps amortize the ~0.35 us
    # per-grid-step pipeline overhead; the neg tile DMA (TB*TN*4 B) and the
    # elementwise VMEM temporaries (a few MiB) remain far below the VMEM cap.
    TB = _pick_tile(B, 8, 8)
    elems_target = 256 * 1024
    tn_target = max(512, elems_target // max(1, TB * P))
    TN = _pick_tile(N, tn_target, 128)
    nb, nn = B // TB, N // TN

    out_shapes = (
        jax.ShapeDtypeStruct((nb, 8, 128), jnp.float32),  # per-B-block loss partials
        jax.ShapeDtypeStruct((nb, 8, 128), jnp.float32),  # per-B-block mask sums
    )

    cost = pl.CostEstimate(
        flops=6 * B * P * N,
        transcendentals=2 * B * P * N,
        bytes_accessed=(pos_preds.size * pos_preds.dtype.itemsize
                        + neg_preds.size * neg_preds.dtype.itemsize
                        + pos_mask.size * pos_mask.dtype.itemsize
                        + 2 * nb * 8 * 128 * 4),
    )

    loss_parts, mask_parts = pl.pallas_call(
        _bpr_partial_kernel,
        out_shape=out_shapes,
        grid=(nb, nn),
        in_specs=[
            pl.BlockSpec((TB, P), lambda bi, ni: (bi, 0)),
            pl.BlockSpec((TB, TN), lambda bi, ni: (bi, ni)),
            pl.BlockSpec((TB, P), lambda bi, ni: (bi, 0)),
        ],
        out_specs=(
            pl.BlockSpec((1, 8, 128), lambda bi, ni: (bi, 0, 0)),
            pl.BlockSpec((1, 8, 128), lambda bi, ni: (bi, 0, 0)),
        ),
        compiler_params=pltpu.CompilerParams(
            dimension_semantics=("parallel", "arbitrary"),
            vmem_limit_bytes=32 * 1024 * 1024,
        ),
        cost_estimate=cost,
    )(pos_preds, neg_preds, pos_mask)

    # Finalize from partials: GLOBAL normalizer = sum(pos_mask) * N.
    total = jnp.sum(loss_parts[:, 0, 0])
    mask_sum = jnp.sum(mask_parts[:, 0, 0])
    # NOTE: same division-by-zero behavior as the PyTorch reference if
    # pos_mask sums to zero (documented precondition).
    return -(total / (mask_sum * jnp.float32(N)))


def bpr_loss_ref(pos_preds, neg_preds, pos_mask):
    """Pure-JAX reference mirroring the PyTorch forward."""
    logits = pos_preds[:, :, None] - neg_preds[:, None, :]
    mask_loss = jax.nn.log_sigmoid(logits) * pos_mask[:, :, None]
    loss = jnp.sum(mask_loss)
    normalizers = jnp.sum(pos_mask) * neg_preds.shape[1]
    return -(loss / normalizers)


if __name__ == "__main__":
    key = jax.random.PRNGKey(0)
    k1, k2, k3 = jax.random.split(key, 3)

    # Small, but exercises multiple parallel B-blocks and the resident
    # accumulate/finalize pattern.
    B, P, N = 16, 8, 512
    pos_preds = jax.random.normal(k1, (B, P), dtype=jnp.float32)
    neg_preds = jax.random.normal(k2, (B, N), dtype=jnp.float32)
    pos_mask = (jax.random.uniform(k3, (B, P)) > 0.3).astype(jnp.float32)
    pos_mask = pos_mask.at[0, 0].set(1.0)  # guarantee non-zero normalizer

    loss = jax.jit(bpr_loss)(pos_preds, neg_preds, pos_mask)
    jax.block_until_ready(loss)

    ref = bpr_loss_ref(pos_preds, neg_preds, pos_mask)
    assert jnp.allclose(loss, ref, atol=1e-5, rtol=1e-5), (loss, ref)
    print("KERNEL_OK")
</pallas_src>

<mosaic_0001>
module attributes {stable_mosaic.version = 11 : i64} {
  func.func @_bpr_partial_kernel(%arg0: i32, %arg1: i32, %arg2: memref<8x8xf32, #tpu.memory_space<vmem>>, %arg3: memref<8x512xf32, #tpu.memory_space<vmem>>, %arg4: memref<8x8xf32, #tpu.memory_space<vmem>>, %arg5: memref<1x8x128xf32, #tpu.memory_space<vmem>>, %arg6: memref<1x8x128xf32, #tpu.memory_space<vmem>>) attributes {dimension_semantics = [#tpu.dimension_semantics<parallel>, #tpu.dimension_semantics<arbitrary>], iteration_bounds = array<i64: 2, 1>, scalar_prefetch = 0 : i64, scratch_operands = 0 : i64, tpu.core_type = #tpu.core_type<tc>, window_params = [{transform_indices = @transform_0, window_bounds = array<i64: 8, 8>}, {transform_indices = @transform_1, window_bounds = array<i64: 8, 512>}, {transform_indices = @transform_2, window_bounds = array<i64: 8, 8>}, {transform_indices = @transform_3, window_bounds = array<i64: 1, 8, 128>}, {transform_indices = @transform_4, window_bounds = array<i64: 1, 8, 128>}]} {
    %c0 = arith.constant 0 : index
    %c0_0 = arith.constant 0 : index
    %0 = vector.load %arg2[%c0, %c0_0] : memref<8x8xf32, #tpu.memory_space<vmem>>, vector<8x8xf32>
    %c0_1 = arith.constant 0 : index
    %c0_2 = arith.constant 0 : index
    %1 = vector.load %arg3[%c0_1, %c0_2] : memref<8x512xf32, #tpu.memory_space<vmem>>, vector<8x512xf32>
    %c0_3 = arith.constant 0 : index
    %c0_4 = arith.constant 0 : index
    %2 = vector.load %arg4[%c0_3, %c0_4] : memref<8x8xf32, #tpu.memory_space<vmem>>, vector<8x8xf32>
    %c0_i32 = arith.constant 0 : i32
    %3 = arith.cmpi eq, %arg1, %c0_i32 : i32
    %4 = arith.extui %3 : i1 to i32
    %c0_i32_5 = arith.constant 0 : i32
    %5 = arith.cmpi ne, %4, %c0_i32_5 : i32
    scf.if %5 {
      %cst_15 = arith.constant 0.000000e+00 : f32
      %29 = vector.broadcast %cst_15 : f32 to vector<1x8x128xf32>
      %c0_16 = arith.constant 0 : index
      %c0_17 = arith.constant 0 : index
      %c0_18 = arith.constant 0 : index
      %30 = vector.load %arg5[%c0_16, %c0_17, %c0_18] : memref<1x8x128xf32, #tpu.memory_space<vmem>>, vector<1x8x128xf32>
      tpu.vector_store %arg5[%c0_16, %c0_17, %c0_18], %29 {strides = array<i32>} : memref<1x8x128xf32, #tpu.memory_space<vmem>>, vector<1x8x128xf32>,
      %cst_19 = arith.constant 0.000000e+00 : f32
      %31 = vector.broadcast %cst_19 : f32 to vector<1x8x128xf32>
      %32 = vector.shape_cast %2 : vector<8x8xf32> to vector<1x8x8xf32>
      %cst_20 = arith.constant dense<0.000000e+00> : vector<1xf32>
      %33 = vector.multi_reduction <add>, %32, %cst_20 [1, 2] : vector<1x8x8xf32> to vector<1xf32>
      %34 = vector.shape_cast %33 : vector<1xf32> to vector<1x1x1xf32>
      %35 = vector.extract %34[0, 0, 0] : f32 from vector<1x1x1xf32>
      %36 = vector.broadcast %35 : f32 to vector<1x8x128xf32>
      %37 = arith.addf %31, %36 : vector<1x8x128xf32>
      %c0_21 = arith.constant 0 : index
      %c0_22 = arith.constant 0 : index
      %c0_23 = arith.constant 0 : index
      %38 = vector.load %arg6[%c0_21, %c0_22, %c0_23] : memref<1x8x128xf32, #tpu.memory_space<vmem>>, vector<1x8x128xf32>
      tpu.vector_store %arg6[%c0_21, %c0_22, %c0_23], %37 {strides = array<i32>} : memref<1x8x128xf32, #tpu.memory_space<vmem>>, vector<1x8x128xf32>,
    } else {
    }
    %6 = vector.shape_cast %0 : vector<8x8xf32> to vector<8x8x1xf32>
    %7 = vector.shape_cast %1 : vector<8x512xf32> to vector<8x1x512xf32>
    %8 = vector.broadcast %6 : vector<8x8x1xf32> to vector<8x8x512xf32>
    %9 = vector.broadcast %7 : vector<8x1x512xf32> to vector<8x8x512xf32>
    %10 = arith.subf %8, %9 : vector<8x8x512xf32>
    %cst = arith.constant 0.000000e+00 : f32
    %11 = vector.broadcast %cst : f32 to vector<8x8x512xf32>
    %12 = arith.minimumf %10, %11 : vector<8x8x512xf32>
    %13 = math.absf %10 : vector<8x8x512xf32>
    %cst_6 = arith.constant 0.000000e+00 : f32
    %14 = vector.broadcast %cst_6 : f32 to vector<8x8x512xf32>
    %15 = arith.subf %14, %13 : vector<8x8x512xf32>
    %16 = math.exp %15 : vector<8x8x512xf32>
    %17 = math.log1p %16 : vector<8x8x512xf32>
    %18 = arith.subf %12, %17 : vector<8x8x512xf32>
    %cst_7 = arith.constant dense<0.000000e+00> : vector<8x8xf32>
    %19 = vector.multi_reduction <add>, %18, %cst_7 [2] : vector<8x8x512xf32> to vector<8x8xf32>
    %c0_8 = arith.constant 0 : index
    %c0_9 = arith.constant 0 : index
    %c0_10 = arith.constant 0 : index
    %20 = vector.load %arg5[%c0_8, %c0_9, %c0_10] : memref<1x8x128xf32, #tpu.memory_space<vmem>>, vector<1x8x128xf32>
    %21 = arith.mulf %19, %2 : vector<8x8xf32>
    %22 = vector.shape_cast %21 : vector<8x8xf32> to vector<1x8x8xf32>
    %cst_11 = arith.constant dense<0.000000e+00> : vector<1xf32>
    %23 = vector.multi_reduction <add>, %22, %cst_11 [1, 2] : vector<1x8x8xf32> to vector<1xf32>
    %24 = vector.shape_cast %23 : vector<1xf32> to vector<1x1x1xf32>
    %25 = vector.extract %24[0, 0, 0] : f32 from vector<1x1x1xf32>
    %26 = vector.broadcast %25 : f32 to vector<1x8x128xf32>
    %27 = arith.addf %20, %26 : vector<1x8x128xf32>
    %c0_12 = arith.constant 0 : index
    %c0_13 = arith.constant 0 : index
    %c0_14 = arith.constant 0 : index
    %28 = vector.load %arg5[%c0_12, %c0_13, %c0_14] : memref<1x8x128xf32, #tpu.memory_space<vmem>>, vector<1x8x128xf32>
    tpu.vector_store %arg5[%c0_12, %c0_13, %c0_14], %27 {strides = array<i32>} : memref<1x8x128xf32, #tpu.memory_space<vmem>>, vector<1x8x128xf32>,
    return
  }
  func.func @transform_0(%arg0: i32, %arg1: i32) -> (i32, i32) {
    %c0_i32 = arith.constant 0 : i32
    %c0_i32_0 = arith.constant 0 : i32
    return %arg0, %c0_i32 : i32, i32
  }
  func.func @transform_1(%arg0: i32, %arg1: i32) -> (i32, i32) {
    %c0_i32 = arith.constant 0 : i32
    return %arg0, %arg1 : i32, i32
  }
  func.func @transform_2(%arg0: i32, %arg1: i32) -> (i32, i32) {
    %c0_i32 = arith.constant 0 : i32
    %c0_i32_0 = arith.constant 0 : i32
    return %arg0, %c0_i32 : i32, i32
  }
  func.func @transform_3(%arg0: i32, %arg1: i32) -> (i32, i32, i32) {
    %c0_i32 = arith.constant 0 : i32
    %c0_i32_0 = arith.constant 0 : i32
    %c0_i32_1 = arith.constant 0 : i32
    return %arg0, %c0_i32, %c0_i32_0 : i32, i32, i32
  }
  func.func @transform_4(%arg0: i32, %arg1: i32) -> (i32, i32, i32) {
    %c0_i32 = arith.constant 0 : i32
    %c0_i32_0 = arith.constant 0 : i32
    %c0_i32_1 = arith.constant 0 : i32
    return %arg0, %c0_i32, %c0_i32_0 : i32, i32, i32
  }
}

</mosaic_0001>

<llo_original>
// kernel: bpr_loss.1
$region0: #{bpr_loss.1}
  #allocation0 [shape = 'u32[]', space=smem, size = 0x4, offset = 0x4, fixed_abs, tag = 'smem constant byte address 0x4 - core index']
  #allocation1 [shape = 'u32[144,128]{1,0:T(1,128)}', space=vmem, size = 0x12000, scoped, tag = 'internal scratch']
  %s0 = inlined_call_operand.vmem [shape: f32[16,8], index: 0, kind: input, shape index: {}]
  %s1 = inlined_call_operand.hbm [shape: f32[16,512], index: 1, kind: input, shape index: {}]
  %s2 = inlined_call_operand.vmem [shape: f32[16,8], index: 2, kind: input, shape index: {}]
  %s3 = inlined_call_operand.vmem [shape: f32[2,8,128], index: 3, kind: output, shape index: {0}]
  %s4 = inlined_call_operand.vmem [shape: f32[2,8,128], index: 4, kind: output, shape index: {1}]
  %5 = xla_tuple %s3, %s4
  %s6 = sld [smem:[#allocation0]]
  $region61: #{bpr_loss.1} parent=0
    _
  %s8 = ssub.s32 1, %s6
  %s9 = scalar_select 0, %s8, %s6
  $region1: #{bpr_loss.1} parent=0
    #allocation2 [shape = 'u8[32768]{0}', space=vmem, size = 0x8000, scoped, tag = 'input window, operand 1']
    #allocation3 [shape = 's32[2]{0}', space=sflag, size = 0x8, scoped, tag = 'scoped memory for bpr_loss.1']
    %10 = vsyncpa [#allocation3], 0
    %s11 = scalar_lea.sflag [#allocation3], 1
    %12 = vsyncpa %s11, 0
    loop: start=0, step=1, limit=4
    $region2: #{bpr_loss.1} parent=1 // loop_pre_header
      _
    $region3: #{bpr_loss.1} parent=1 // loop_header
      %s14 = sphi 0, %s18
      %p15 = scmp.ge.s32.totalorder %s14, 4
      %s21 = sphi 0, %s33
      %s22 = sphi 0, %s29
      %s23 = sphi 0, %s21
      %s24 = sphi 0, %s22
      %s25 = sphi 0, %s23
      %s26 = sphi 0, %s24
      %s36 = sphi 0, %s38
      %s39 = sphi 0, %s36
      %s40 = sphi 0, %s39
      %s56 = sphi 0, %s40
      %s64 = sphi 0, %s66
      %s67 = sphi 0, %s64
      %s68 = sphi 0, %s67
      %s84 = sphi 0, %s68
      %s90 = sphi 0, %s92
      %s93 = sphi 0, %s90
      %s94 = sphi 0, %s93
      %s110 = sphi 0, %s94
      %s116 = sphi 0, %s118
      %s119 = sphi 0, %s116
      %s120 = sphi 0, %s119
      %s136 = sphi 0, %s120
      %s142 = sphi 0, %s144
      %s145 = sphi 0, %s142
      %s146 = sphi 0, %s145
      %s162 = sphi 0, %s146
    $region4: #{bpr_loss.1} parent=1 // loop_header_branch
      %17 = sbr.rel (%p15) target = $region8
    $region5: #{bpr_loss.1} parent=1 // loop_body
      %s19 = ssub.s32 %s14, 1
      %s20 = ssub.s32 %s14, 2
      %s27 = sadd.s32 1, %s22
      %p28 = scmp.ge.s32.totalorder %s27, 1
      %s29 = scalar_select %p28, 0, %s27
      %s30 = sadd.s32 1, %s21
      %s31 = scalar_select %p28, %s30, %s21
      %p32 = scmp.ge.s32.totalorder %s31, 2
      %s33 = scalar_select %p32, 0, %s31
      %s34 = ssub.s32 %s21, %s33
      %p35 = scmp.eq.s32.totalorder %s34, 0
      %s37 = sadd.s32 %s36, 1
      %s38 = scalar_select %p35, %s36, %s37
      %p41 = pneg %p35
      %p42 = scmp.eq.s32.totalorder %s14, 1
      %p43 = por %p41, %p42
      %p44 = scmp.ne.s32.totalorder %s36, %s39
      %p45 = scmp.eq.s32.totalorder %s14, 0
      %p46 = por %p44, %p45
      %p47 = scmp.ne.s32.totalorder %s36, %s39
      %p48 = scmp.eq.s32.totalorder %s19, 1
      %p49 = por %p47, %p48
      %p50 = scmp.ne.s32.totalorder %s39, %s40
      %p51 = scmp.eq.s32.totalorder %s19, 0
      %p52 = por %p50, %p51
      %p53 = scmp.ne.s32.totalorder %s39, %s40
      %p54 = scmp.eq.s32.totalorder %s20, 1
      %p55 = por %p53, %p54
      %p57 = scmp.ne.s32.totalorder %s40, %s56
      %p58 = scmp.eq.s32.totalorder %s20, 0
      %p59 = por %p57, %p58
      %s60 = ssub.s32 %s21, %s33
      %s61 = ssub.s32 %s22, %s29
      %s62 = sor.u32 %s60, %s61
      %p63 = scmp.eq.s32.totalorder %s62, 0
      %s65 = sadd.s32 %s64, 1
      %s66 = scalar_select %p63, %s64, %s65
      %p69 = pneg %p63
      %p70 = scmp.eq.s32.totalorder %s14, 1
      %p71 = por %p69, %p70
      %p72 = scmp.ne.s32.totalorder %s64, %s67
      %p73 = scmp.eq.s32.totalorder %s14, 0
      %p74 = por %p72, %p73
      %p75 = scmp.ne.s32.totalorder %s64, %s67
      %p76 = scmp.eq.s32.totalorder %s19, 1
      %p77 = por %p75, %p76
      %p78 = scmp.ne.s32.totalorder %s67, %s68
      %p79 = scmp.eq.s32.totalorder %s19, 0
      %p80 = por %p78, %p79
      %p81 = scmp.ne.s32.totalorder %s67, %s68
      %p82 = scmp.eq.s32.totalorder %s20, 1
      %p83 = por %p81, %p82
      %p85 = scmp.ne.s32.totalorder %s68, %s84
      %p86 = scmp.eq.s32.totalorder %s20, 0
      %p87 = por %p85, %p86
      %s88 = ssub.s32 %s21, %s33
      %p89 = scmp.eq.s32.totalorder %s88, 0
      %s91 = sadd.s32 %s90, 1
      %s92 = scalar_select %p89, %s90, %s91
      %p95 = pneg %p89
      %p96 = scmp.eq.s32.totalorder %s14, 1
      %p97 = por %p95, %p96
      %p98 = scmp.ne.s32.totalorder %s90, %s93
      %p99 = scmp.eq.s32.totalorder %s14, 0
      %p100 = por %p98, %p99
      %p101 = scmp.ne.s32.totalorder %s90, %s93
      %p102 = scmp.eq.s32.totalorder %s19, 1
      %p103 = por %p101, %p102
      %p104 = scmp.ne.s32.totalorder %s93, %s94
      %p105 = scmp.eq.s32.totalorder %s19, 0
      %p106 = por %p104, %p105
      %p107 = scmp.ne.s32.totalorder %s93, %s94
      %p108 = scmp.eq.s32.totalorder %s20, 1
      %p109 = por %p107, %p108
      %p111 = scmp.ne.s32.totalorder %s94, %s110
      %p112 = scmp.eq.s32.totalorder %s20, 0
      %p113 = por %p111, %p112
      %s114 = ssub.s32 %s21, %s33
      %p115 = scmp.eq.s32.totalorder %s114, 0
      %s117 = sadd.s32 %s116, 1
      %s118 = scalar_select %p115, %s116, %s117
      %p121 = pneg %p115
      %p122 = scmp.eq.s32.totalorder %s14, 1
      %p123 = por %p121, %p122
      %p124 = scmp.ne.s32.totalorder %s116, %s119
      %p125 = scmp.eq.s32.totalorder %s14, 0
      %p126 = por %p124, %p125
      %p127 = scmp.ne.s32.totalorder %s116, %s119
      %p128 = scmp.eq.s32.totalorder %s19, 1
      %p129 = por %p127, %p128
      %p130 = scmp.ne.s32.totalorder %s119, %s120
      %p131 = scmp.eq.s32.totalorder %s19, 0
      %p132 = por %p130, %p131
      %p133 = scmp.ne.s32.totalorder %s119, %s120
      %p134 = scmp.eq.s32.totalorder %s20, 1
      %p135 = por %p133, %p134
      %p137 = scmp.ne.s32.totalorder %s120, %s136
      %p138 = scmp.eq.s32.totalorder %s20, 0
      %p139 = por %p137, %p138
      %s140 = ssub.s32 %s21, %s33
      %p141 = scmp.eq.s32.totalorder %s140, 0
      %s143 = sadd.s32 %s142, 1
      %s144 = scalar_select %p141, %s142, %s143
      %p147 = pneg %p141
      %p148 = scmp.eq.s32.totalorder %s14, 1
      %p149 = por %p147, %p148
      %p150 = scmp.ne.s32.totalorder %s142, %s145
      %p151 = scmp.eq.s32.totalorder %s14, 0
      %p152 = por %p150, %p151
      %p153 = scmp.ne.s32.totalorder %s142, %s145
      %p154 = scmp.eq.s32.totalorder %s19, 1
      %p155 = por %p153, %p154
      %p156 = scmp.ne.s32.totalorder %s145, %s146
      %p157 = scmp.eq.s32.totalorder %s19, 0
      %p158 = por %p156, %p157
      %p159 = scmp.ne.s32.totalorder %s145, %s146
      %p160 = scmp.eq.s32.totalorder %s20, 1
      %p161 = por %p159, %p160
      %p163 = scmp.ne.s32.totalorder %s146, %s162
      %p164 = scmp.eq.s32.totalorder %s20, 0
      %p165 = por %p163, %p164
      %p166 = scmp.le.s32.totalorder 1, %s14
      %p167 = scmp.lt.s32.totalorder %s14, 3
      %p168 = pnand %p166, %p167
      %p169 = pneg %p168
      // Predicated region
      $region9: #{bpr_loss.1} parent=5 // pred_check
        _
      $region10: #{bpr_loss.1} parent=5 // pred_check_branch
        %171 = sbr.rel (%p168) target = $region12
      $region11: #{bpr_loss.1} parent=5 // pred_region
        %s172 = ssub.s32 %s14, 1
      $region12: #{bpr_loss.1} parent=5 // pred_fallthru
        _
      %p173 = scmp.lt.s32.totalorder %s14, 2
      // Predicated region
      $region13: #{bpr_loss.1} parent=5 // pred_check
        %p174 = pneg %p173
      $region14: #{bpr_loss.1} parent=5 // pred_check_branch
        %176 = sbr.rel (%p174) target = $region16
      $region15: #{bpr_loss.1} parent=5 // pred_region
        // Predicated region
        $region17: #{bpr_loss.1} parent=15 // pred_check
          %p177 = pneg %p46
        $region18: #{bpr_loss.1} parent=15 // pred_check_branch
          %179 = sbr.rel (%p177) target = $region20
        $region19: #{bpr_loss.1} parent=15 // pred_region
          %p180 = scmp.lt.s32.totalorder %s21, 1
          %s181 = scalar_select %p180, %s21, 1
          %s182 = smul.addr %s181, 8
          %s183 = scalar_lea.vmem %s0, %s182
        $region20: #{bpr_loss.1} parent=15 // pred_fallthru
          _
        // Predicated region
        $region21: #{bpr_loss.1} parent=15 // pred_check
          %p184 = pneg %p74
        $region22: #{bpr_loss.1} parent=15 // pred_check_branch
          %186 = sbr.rel (%p184) target = $region24
        $region23: #{bpr_loss.1} parent=15 // pred_region
          %s187 = sand.u32 %s64, 1
          %s188 = scalar_lea.sflag [#allocation3], %s187
          %s189 = sand.u32 %s64, 1
          %s190 = smul.addr %s189, 32
          %s191 = scalar_lea.vmem [#allocation2], %s190
          %s192 = smul.u32 4, %s22
          %s194 = ssub.s32 512, 512
          %195 = vsyncadd %s188, %s194
          %s196 = smul.addr %s21, 4
          %s197 = sadd.s32 %s192, %s196
          %s198 = smul.addr %s197, 128
          %s199 = scalar_lea.hbm %s1, %s198
          %s201 = sshll.u32 %s191, 4
          %s202 = int_to_ptr.vmem [resolvable:$true] %s201
          %204 = dma.hbm_to_vmem [thread:$0]  %s199, 512, %s202, %s188
        $region24: #{bpr_loss.1} parent=15 // pred_fallthru
          _
        // Predicated region
        $region25: #{bpr_loss.1} parent=15 // pred_check
          %p205 = pneg %p100
        $region26: #{bpr_loss.1} parent=15 // pred_check_branch
          %207 = sbr.rel (%p205) target = $region28
        $region27: #{bpr_loss.1} parent=15 // pred_region
          %p208 = scmp.lt.s32.totalorder %s21, 1
          %s209 = scalar_select %p208, %s21, 1
          %s210 = smul.addr %s209, 8
          %s211 = scalar_lea.vmem %s2, %s210
        $region28: #{bpr_loss.1} parent=15 // pred_fallthru
          _
      $region16: #{bpr_loss.1} parent=5 // pred_fallthru
        _
      %p212 = scmp.le.s32.totalorder 1, %s14
      %p213 = scmp.lt.s32.totalorder %s14, 3
      %p214 = pnand %p212, %p213
      %p215 = pneg %p214
      // Predicated region
      $region29: #{bpr_loss.1} parent=5 // pred_check
        _
      $region30: #{bpr_loss.1} parent=5 // pred_check_branch
        %217 = sbr.rel (%p214) target = $region32
      $region31: #{bpr_loss.1} parent=5 // pred_region
        %s218 = ssub.s32 %s14, 1
        %s219 = sand.u32 %s67, 1
        %s220 = scalar_lea.sflag [#allocation3], %s219
        %s221 = sand.u32 %s67, 1
        %s222 = smul.addr %s221, 32
        %s223 = scalar_lea.vmem [#allocation2], %s222
        // Predicated region
        $region33: #{bpr_loss.1} parent=31 // pred_check
          %p224 = pneg %p80
        $region34: #{bpr_loss.1} parent=31 // pred_check_branch
          %226 = sbr.rel (%p224) target = $region36
        $region35: #{bpr_loss.1} parent=31 // pred_region
          %227 = dma.done %s220, 512
        $region36: #{bpr_loss.1} parent=31 // pred_fallthru
          _
        %p228 = scmp.lt.s32.totalorder %s23, 1
        %s229 = scalar_select %p228, %s23, 1
        %s230 = smul.addr %s229, 8
        %s231 = scalar_lea.vmem %s0, %s230
        %p232 = pneg %p52
        %p233 = pneg %p49
        %s234 = sand.u32 %s67, 1
        %s235 = scalar_lea.sflag [#allocation3], %s234
        %s236 = sand.u32 %s67, 1
        %s237 = smul.addr %s236, 32
        %s238 = scalar_lea.vmem [#allocation2], %s237
        %p239 = pneg %p80
        %p240 = pneg %p77
        %p241 = scmp.lt.s32.totalorder %s23, 1
        %s242 = scalar_select %p241, %s23, 1
        %s243 = smul.addr %s242, 8
        %s244 = scalar_lea.vmem %s2, %s243
        %p245 = pneg %p106
        %p246 = pneg %p103
        %p247 = pneg %p132
        %p248 = pneg %p129
        %p249 = scmp.lt.s32.totalorder %s23, 1
        %s250 = scalar_select %p249, %s23, 1
        %s251 = smul.addr %s250, 8
        %s252 = scalar_lea.vmem %s3, %s251
        %p253 = pneg %p158
        %p254 = pneg %p155
        %p255 = scmp.lt.s32.totalorder %s23, 1
        %s256 = scalar_select %p255, %s23, 1
        %s257 = smul.addr %s256, 8
        %s258 = scalar_lea.vmem %s4, %s257
        %p259 = scmp.lt.s32.totalorder %s23, 1
        %s260 = scalar_select %p259, %s23, 1
        %s261 = smul.addr %s260, 8
        %s262 = scalar_lea.vmem %s0, %s261
        %s263 = smul.u32 4, %s24
        %p264 = scmp.lt.s32.totalorder %s23, 1
        %s265 = scalar_select %p264, %s23, 1
        %s266 = smul.addr %s265, 8
        %s267 = scalar_lea.vmem %s2, %s266
        %p268 = scmp.lt.s32.totalorder %s23, 1
        %s269 = scalar_select %p268, %s23, 1
        %s270 = smul.addr %s269, 8
        %s271 = scalar_lea.vmem %s3, %s270
        %p272 = scmp.lt.s32.totalorder %s23, 1
        %s273 = scalar_select %p272, %s23, 1
        %s274 = smul.addr %s273, 8
        %s275 = scalar_lea.vmem %s4, %s274
        %v276 = vld [vmem:[%s262] sm:$0xff]
        %v277 = vld [vmem:[%s223] sm:$0xff]
        %v278 = vld [vmem:[%s223 + $0x8] sm:$0xff]
        %v279 = vld [vmem:[%s223 + $0x10] sm:$0xff]
        %v280 = vld [vmem:[%s223 + $0x18] sm:$0xff]
        %v281 = vld [vmem:[%s267] sm:$0xff]
        %p282 = scmp.eq.s32.totalorder %s24, 0
        // Predicated region
        $region37: #{bpr_loss.1} parent=31 // pred_check
          %p283 = pneg %p282
        $region38: #{bpr_loss.1} parent=31 // pred_check_branch
          %285 = sbr.rel (%p283) target = $region40
        $region39: #{bpr_loss.1} parent=31 // pred_region
          %286 = vst [vmem:[%s271] sm:$0xff] 0.0
          %vm287 = vcmask 64512
          %v288 = vsel %vm287, %v281, 0.0
          %289 = vadd.xlane.f32.xlu0 %v288
          %v290 = vpop.xlane.xlu0 %289
          %v291 = vrot.slane %v290, 4
          %v292 = vadd.f32 %v290, %v291
          %v293 = vrot.slane %v292, 2
          %v294 = vadd.f32 %v292, %v293
          %v295 = vrot.slane %v294, 1
          %v296 = vadd.f32 %v294, %v295
          %s297 = vtos %v296
          %v298 = vstv %s297
          %v299 = vadd.f32 %v298, 0.0
          %300 = vst [vmem:[%s275] sm:$0xff] %v299
        $region40: #{bpr_loss.1} parent=31 // pred_fallthru
          _
        %v301 = vlaneseq
        %v302 = vshrl.u32 %v301, 7
        %v303 = vsub.s32 0, %v302
        %v304 = vrot.slane %v276, %v303
        %306 = vbcast.lane.b32.xlu0 %v304, 256
        %v307 = vpop.permute.xlu0 %306
        %v308 = vlaneseq
        %v309 = vshrl.u32 %v308, 7
        %v310 = vsub.s32 1, %v309
        %v311 = vrot.slane %v276, %v310
        %313 = vbcast.lane.b32.xlu0 %v311, 256
        %v314 = vpop.permute.xlu0 %313
        %v315 = vlaneseq
        %v316 = vshrl.u32 %v315, 7
        %v317 = vsub.s32 2, %v316
        %v318 = vrot.slane %v276, %v317
        %320 = vbcast.lane.b32.xlu0 %v318, 256
        %v321 = vpop.permute.xlu0 %320
        %v322 = vlaneseq
        %v323 = vshrl.u32 %v322, 7
        %v324 = vsub.s32 3, %v323
        %v325 = vrot.slane %v276, %v324
        %327 = vbcast.lane.b32.xlu0 %v325, 256
        %v328 = vpop.permute.xlu0 %327
        %v329 = vlaneseq
        %v330 = vshrl.u32 %v329, 7
        %v331 = vsub.s32 4, %v330
        %v332 = vrot.slane %v276, %v331
        %334 = vbcast.lane.b32.xlu0 %v332, 256
        %v335 = vpop.permute.xlu0 %334
        %v336 = vlaneseq
        %v337 = vshrl.u32 %v336, 7
        %v338 = vsub.s32 5, %v337
        %v339 = vrot.slane %v276, %v338
        %341 = vbcast.lane.b32.xlu0 %v339, 256
        %v342 = vpop.permute.xlu0 %341
        %v343 = vlaneseq
        %v344 = vshrl.u32 %v343, 7
        %v345 = vsub.s32 6, %v344
        %v346 = vrot.slane %v276, %v345
        %348 = vbcast.lane.b32.xlu0 %v346, 256
        %v349 = vpop.permute.xlu0 %348
        %v350 = vlaneseq
        %v351 = vshrl.u32 %v350, 7
        %v352 = vsub.s32 7, %v351
        %v353 = vrot.slane %v276, %v352
        %355 = vbcast.lane.b32.xlu0 %v353, 256
        %v356 = vpop.permute.xlu0 %355
        %v361 = vcombine.low %v277, %v278
        %v362 = vcombine.high %v277, %v278
        %v363 = vcombine.low %v279, %v280
        %v364 = vcombine.high %v279, %v280
        %v366 = vunpack.c.l.s4 1966171168
        %v367 = vunpack.c.0.s8 %v366
        %v368 = vlaneseq
        %v369 = vshrl.u32 %v368, 7
        %v370 = vsub.s32 %v367, %v369
        %v371 = vrot.slane %v361, %v370
        %v373 = vunpack.c.l.s4 1966171168
        %v374 = vunpack.c.0.s8 %v373
        %v375 = vlaneseq
        %v376 = vshrl.u32 %v375, 7
        %v377 = vsub.s32 %v374, %v376
        %v378 = vrot.slane %v362, %v377
        %v380 = vunpack.c.l.s4 1966171168
        %v381 = vunpack.c.0.s8 %v380
        %v382 = vlaneseq
        %v383 = vshrl.u32 %v382, 7
        %v384 = vsub.s32 %v381, %v383
        %v385 = vrot.slane %v363, %v384
        %v387 = vunpack.c.l.s4 1966171168
        %v388 = vunpack.c.0.s8 %v387
        %v389 = vlaneseq
        %v390 = vshrl.u32 %v389, 7
        %v391 = vsub.s32 %v388, %v390
        %v392 = vrot.slane %v364, %v391
        %v393 = vcombine.low %v371, %v385
        %v394 = vcombine.high %v371, %v385
        %v395 = vcombine.low %v378, %v392
        %v396 = vcombine.high %v378, %v392
        %v398 = vunpack.c.l.s4 1966171168
        %v399 = vunpack.c.0.s8 %v398
        %v400 = vlaneseq
        %v401 = vshrl.u32 %v400, 7
        %v402 = vsub.s32 %v399, %v401
        %v403 = vrot.slane %v393, %v402
        %v405 = vunpack.c.l.s4 1966171168
        %v406 = vunpack.c.0.s8 %v405
        %v407 = vlaneseq
        %v408 = vshrl.u32 %v407, 7
        %v409 = vsub.s32 %v406, %v408
        %v410 = vrot.slane %v395, %v409
        %v412 = vunpack.c.l.s4 1966171168
        %v413 = vunpack.c.0.s8 %v412
        %v414 = vlaneseq
        %v415 = vshrl.u32 %v414, 7
        %v416 = vsub.s32 %v413, %v415
        %v417 = vrot.slane %v394, %v416
        %v419 = vunpack.c.l.s4 1966171168
        %v420 = vunpack.c.0.s8 %v419
        %v421 = vlaneseq
        %v422 = vshrl.u32 %v421, 7
        %v423 = vsub.s32 %v420, %v422
        %v424 = vrot.slane %v396, %v423
        %v425 = vcombine.high %v403, %v403
        %v426 = vcombine.high %v410, %v410
        %v427 = vcombine.high %v417, %v417
        %v428 = vcombine.high %v424, %v424
        %v429 = vlaneseq
        %v430 = vshrl.u32 %v429, 7
        %v431 = vsub.s32 0, %v430
        %v432 = vrot.slane %v403, %v431
        %v433 = vlaneseq
        %v434 = vshrl.u32 %v433, 7
        %v435 = vsub.s32 1, %v434
        %v436 = vrot.slane %v403, %v435
        %v437 = vlaneseq
        %v438 = vshrl.u32 %v437, 7
        %v439 = vsub.s32 2, %v438
        %v440 = vrot.slane %v403, %v439
        %v441 = vlaneseq
        %v442 = vshrl.u32 %v441, 7
        %v443 = vsub.s32 3, %v442
        %v444 = vrot.slane %v403, %v443
        %v445 = vlaneseq
        %v446 = vshrl.u32 %v445, 7
        %v447 = vsub.s32 0, %v446
        %v448 = vrot.slane %v417, %v447
        %v449 = vlaneseq
        %v450 = vshrl.u32 %v449, 7
        %v451 = vsub.s32 1, %v450
        %v452 = vrot.slane %v417, %v451
        %v453 = vlaneseq
        %v454 = vshrl.u32 %v453, 7
        %v455 = vsub.s32 2, %v454
        %v456 = vrot.slane %v417, %v455
        %v457 = vlaneseq
        %v458 = vshrl.u32 %v457, 7
        %v459 = vsub.s32 3, %v458
        %v460 = vrot.slane %v417, %v459
        %v461 = vlaneseq
        %v462 = vshrl.u32 %v461, 7
        %v463 = vsub.s32 0, %v462
        %v464 = vrot.slane %v425, %v463
        %v465 = vlaneseq
        %v466 = vshrl.u32 %v465, 7
        %v467 = vsub.s32 1, %v466
        %v468 = vrot.slane %v425, %v467
        %v469 = vlaneseq
        %v470 = vshrl.u32 %v469, 7
        %v471 = vsub.s32 2, %v470
        %v472 = vrot.slane %v425, %v471
        %v473 = vlaneseq
        %v474 = vshrl.u32 %v473, 7
        %v475 = vsub.s32 3, %v474
        %v476 = vrot.slane %v425, %v475
        %v477 = vlaneseq
        %v478 = vshrl.u32 %v477, 7
        %v479 = vsub.s32 0, %v478
        %v480 = vrot.slane %v427, %v479
        %v481 = vlaneseq
        %v482 = vshrl.u32 %v481, 7
        %v483 = vsub.s32 1, %v482
        %v484 = vrot.slane %v427, %v483
        %v485 = vlaneseq
        %v486 = vshrl.u32 %v485, 7
        %v487 = vsub.s32 2, %v486
        %v488 = vrot.slane %v427, %v487
        %v489 = vlaneseq
        %v490 = vshrl.u32 %v489, 7
        %v491 = vsub.s32 3, %v490
        %v492 = vrot.slane %v427, %v491
        %v493 = vlaneseq
        %v494 = vshrl.u32 %v493, 7
        %v495 = vsub.s32 0, %v494
        %v496 = vrot.slane %v410, %v495
        %v497 = vlaneseq
        %v498 = vshrl.u32 %v497, 7
        %v499 = vsub.s32 1, %v498
        %v500 = vrot.slane %v410, %v499
        %v501 = vlaneseq
        %v502 = vshrl.u32 %v501, 7
        %v503 = vsub.s32 2, %v502
        %v504 = vrot.slane %v410, %v503
        %v505 = vlaneseq
        %v506 = vshrl.u32 %v505, 7
        %v507 = vsub.s32 3, %v506
        %v508 = vrot.slane %v410, %v507
        %v509 = vlaneseq
        %v510 = vshrl.u32 %v509, 7
        %v511 = vsub.s32 0, %v510
        %v512 = vrot.slane %v424, %v511
        %v513 = vlaneseq
        %v514 = vshrl.u32 %v513, 7
        %v515 = vsub.s32 1, %v514
        %v516 = vrot.slane %v424, %v515
        %v517 = vlaneseq
        %v518 = vshrl.u32 %v517, 7
        %v519 = vsub.s32 2, %v518
        %v520 = vrot.slane %v424, %v519
        %v521 = vlaneseq
        %v522 = vshrl.u32 %v521, 7
        %v523 = vsub.s32 3, %v522
        %v524 = vrot.slane %v424, %v523
        %v525 = vlaneseq
        %v526 = vshrl.u32 %v525, 7
        %v527 = vsub.s32 0, %v526
        %v528 = vrot.slane %v426, %v527
        %v529 = vlaneseq
        %v530 = vshrl.u32 %v529, 7
        %v531 = vsub.s32 1, %v530
        %v532 = vrot.slane %v426, %v531
        %v533 = vlaneseq
        %v534 = vshrl.u32 %v533, 7
        %v535 = vsub.s32 2, %v534
        %v536 = vrot.slane %v426, %v535
        %v537 = vlaneseq
        %v538 = vshrl.u32 %v537, 7
        %v539 = vsub.s32 3, %v538
        %v540 = vrot.slane %v426, %v539
        %v541 = vlaneseq
        %v542 = vshrl.u32 %v541, 7
        %v543 = vsub.s32 0, %v542
        %v544 = vrot.slane %v428, %v543
        %v545 = vlaneseq
        %v546 = vshrl.u32 %v545, 7
        %v547 = vsub.s32 1, %v546
        %v548 = vrot.slane %v428, %v547
        %v549 = vlaneseq
        %v550 = vshrl.u32 %v549, 7
        %v551 = vsub.s32 2, %v550
        %v552 = vrot.slane %v428, %v551
        %v553 = vlaneseq
        %v554 = vshrl.u32 %v553, 7
        %v555 = vsub.s32 3, %v554
        %v556 = vrot.slane %v428, %v555
        %v589 = vsub.f32 %v307, %v432
        %v590 = vsub.f32 %v307, %v436
        %v591 = vsub.f32 %v307, %v440
        %v592 = vsub.f32 %v307, %v444
        %v593 = vsub.f32 %v314, %v448
        %v594 = vsub.f32 %v314, %v452
        %v595 = vsub.f32 %v314, %v456
        %v596 = vsub.f32 %v314, %v460
        %v597 = vsub.f32 %v321, %v464
        %v598 = vsub.f32 %v321, %v468
        %v599 = vsub.f32 %v321, %v472
        %v600 = vsub.f32 %v321, %v476
        %v601 = vsub.f32 %v328, %v480
        %v602 = vsub.f32 %v328, %v484
        %v603 = vsub.f32 %v328, %v488
        %v604 = vsub.f32 %v328, %v492
        %v605 = vsub.f32 %v335, %v496
        %v606 = vsub.f32 %v335, %v500
        %v607 = vsub.f32 %v335, %v504
        %v608 = vsub.f32 %v335, %v508
        %v609 = vsub.f32 %v342, %v512
        %v610 = vsub.f32 %v342, %v516
        %v611 = vsub.f32 %v342, %v520
        %v612 = vsub.f32 %v342, %v524
        %v613 = vsub.f32 %v349, %v528
        %v614 = vsub.f32 %v349, %v532
        %v615 = vsub.f32 %v349, %v536
        %v616 = vsub.f32 %v349, %v540
        %v617 = vsub.f32 %v356, %v544
        %v618 = vsub.f32 %v356, %v548
        %v619 = vsub.f32 %v356, %v552
        %v620 = vsub.f32 %v356, %v556
        %v621 = vmin.f32 %v589, 0.0
        %v622 = vmin.f32 %v590, 0.0
        %v623 = vmin.f32 %v591, 0.0
        %v624 = vmin.f32 %v592, 0.0
        %v625 = vmin.f32 %v593, 0.0
        %v626 = vmin.f32 %v594, 0.0
        %v627 = vmin.f32 %v595, 0.0
        %v628 = vmin.f32 %v596, 0.0
        %v629 = vmin.f32 %v597, 0.0
        %v630 = vmin.f32 %v598, 0.0
        %v631 = vmin.f32 %v599, 0.0
        %v632 = vmin.f32 %v600, 0.0
        %v633 = vmin.f32 %v601, 0.0
        %v634 = vmin.f32 %v602, 0.0
        %v635 = vmin.f32 %v603, 0.0
        %v636 = vmin.f32 %v604, 0.0
        %v637 = vmin.f32 %v605, 0.0
        %v638 = vmin.f32 %v606, 0.0
        %v639 = vmin.f32 %v607, 0.0
        %v640 = vmin.f32 %v608, 0.0
        %v641 = vmin.f32 %v609, 0.0
        %v642 = vmin.f32 %v610, 0.0
        %v643 = vmin.f32 %v611, 0.0
        %v644 = vmin.f32 %v612, 0.0
        %v645 = vmin.f32 %v613, 0.0
        %v646 = vmin.f32 %v614, 0.0
        %v647 = vmin.f32 %v615, 0.0
        %v648 = vmin.f32 %v616, 0.0
        %v649 = vmin.f32 %v617, 0.0
        %v650 = vmin.f32 %v618, 0.0
        %v651 = vmin.f32 %v619, 0.0
        %v652 = vmin.f32 %v620, 0.0
        %v653 = vand.u32 2147483647, %v589
        %v654 = vand.u32 2147483647, %v590
        %v655 = vand.u32 2147483647, %v591
        %v656 = vand.u32 2147483647, %v592
        %v657 = vand.u32 2147483647, %v593
        %v658 = vand.u32 2147483647, %v594
        %v659 = vand.u32 2147483647, %v595
        %v660 = vand.u32 2147483647, %v596
        %v661 = vand.u32 2147483647, %v597
        %v662 = vand.u32 2147483647, %v598
        %v663 = vand.u32 2147483647, %v599
        %v664 = vand.u32 2147483647, %v600
        %v665 = vand.u32 2147483647, %v601
        %v666 = vand.u32 2147483647, %v602
        %v667 = vand.u32 2147483647, %v603
        %v668 = vand.u32 2147483647, %v604
        %v669 = vand.u32 2147483647, %v605
        %v670 = vand.u32 2147483647, %v606
        %v671 = vand.u32 2147483647, %v607
        %v672 = vand.u32 2147483647, %v608
        %v673 = vand.u32 2147483647, %v609
        %v674 = vand.u32 2147483647, %v610
        %v675 = vand.u32 2147483647, %v611
        %v676 = vand.u32 2147483647, %v612
        %v677 = vand.u32 2147483647, %v613
        %v678 = vand.u32 2147483647, %v614
        %v679 = vand.u32 2147483647, %v615
        %v680 = vand.u32 2147483647, %v616
        %v681 = vand.u32 2147483647, %v617
        %v682 = vand.u32 2147483647, %v618
        %v683 = vand.u32 2147483647, %v619
        %v684 = vand.u32 2147483647, %v620
        %v685 = vsub.f32 0.0, %v653
        %v686 = vsub.f32 0.0, %v654
        %v687 = vsub.f32 0.0, %v655
        %v688 = vsub.f32 0.0, %v656
        %v689 = vsub.f32 0.0, %v657
        %v690 = vsub.f32 0.0, %v658
        %v691 = vsub.f32 0.0, %v659
        %v692 = vsub.f32 0.0, %v660
        %v693 = vsub.f32 0.0, %v661
        %v694 = vsub.f32 0.0, %v662
        %v695 = vsub.f32 0.0, %v663
        %v696 = vsub.f32 0.0, %v664
        %v697 = vsub.f32 0.0, %v665
        %v698 = vsub.f32 0.0, %v666
        %v699 = vsub.f32 0.0, %v667
        %v700 = vsub.f32 0.0, %v668
        %v701 = vsub.f32 0.0, %v669
        %v702 = vsub.f32 0.0, %v670
        %v703 = vsub.f32 0.0, %v671
        %v704 = vsub.f32 0.0, %v672
        %v705 = vsub.f32 0.0, %v673
        %v706 = vsub.f32 0.0, %v674
        %v707 = vsub.f32 0.0, %v675
        %v708 = vsub.f32 0.0, %v676
        %v709 = vsub.f32 0.0, %v677
        %v710 = vsub.f32 0.0, %v678
        %v711 = vsub.f32 0.0, %v679
        %v712 = vsub.f32 0.0, %v680
        %v713 = vsub.f32 0.0, %v681
        %v714 = vsub.f32 0.0, %v682
        %v715 = vsub.f32 0.0, %v683
        %v716 = vsub.f32 0.0, %v684
        %v717 = vmul.f32 %v685, 1.442695
        %v718 = vpow.pop %v717
        %v719 = vmul.f32 %v686, 1.442695
        %v720 = vpow.pop %v719
        %v721 = vmul.f32 %v687, 1.442695
        %v722 = vpow.pop %v721
        %v723 = vmul.f32 %v688, 1.442695
        %v724 = vpow.pop %v723
        %v725 = vmul.f32 %v689, 1.442695
        %v726 = vpow.pop %v725
        %v727 = vmul.f32 %v690, 1.442695
        %v728 = vpow.pop %v727
        %v729 = vmul.f32 %v691, 1.442695
        %v730 = vpow.pop %v729
        %v731 = vmul.f32 %v692, 1.442695
        %v732 = vpow.pop %v731
        %v733 = vmul.f32 %v693, 1.442695
        %v734 = vpow.pop %v733
        %v735 = vmul.f32 %v694, 1.442695
        %v736 = vpow.pop %v735
        %v737 = vmul.f32 %v695, 1.442695
        %v738 = vpow.pop %v737
        %v739 = vmul.f32 %v696, 1.442695
        %v740 = vpow.pop %v739
        %v741 = vmul.f32 %v697, 1.442695
        %v742 = vpow.pop %v741
        %v743 = vmul.f32 %v698, 1.442695
        %v744 = vpow.pop %v743
        %v745 = vmul.f32 %v699, 1.442695
        %v746 = vpow.pop %v745
        %v747 = vmul.f32 %v700, 1.442695
        %v748 = vpow.pop %v747
        %v749 = vmul.f32 %v701, 1.442695
        %v750 = vpow.pop %v749
        %v751 = vmul.f32 %v702, 1.442695
        %v752 = vpow.pop %v751
        %v753 = vmul.f32 %v703, 1.442695
        %v754 = vpow.pop %v753
        %v755 = vmul.f32 %v704, 1.442695
        %v756 = vpow.pop %v755
        %v757 = vmul.f32 %v705, 1.442695
        %v758 = vpow.pop %v757
        %v759 = vmul.f32 %v706, 1.442695
        %v760 = vpow.pop %v759
        %v761 = vmul.f32 %v707, 1.442695
        %v762 = vpow.pop %v761
        %v763 = vmul.f32 %v708, 1.442695
        %v764 = vpow.pop %v763
        %v765 = vmul.f32 %v709, 1.442695
        %v766 = vpow.pop %v765
        %v767 = vmul.f32 %v710, 1.442695
        %v768 = vpow.pop %v767
        %v769 = vmul.f32 %v711, 1.442695
        %v770 = vpow.pop %v769
        %v771 = vmul.f32 %v712, 1.442695
        %v772 = vpow.pop %v771
        %v773 = vmul.f32 %v713, 1.442695
        %v774 = vpow.pop %v773
        %v775 = vmul.f32 %v714, 1.442695
        %v776 = vpow.pop %v775
        %v777 = vmul.f32 %v715, 1.442695
        %v778 = vpow.pop %v777
        %v779 = vmul.f32 %v716, 1.442695
        %v780 = vpow.pop %v779
        %v781 = vadd.f32 %v718, 1.0
        %v782 = vlog2.pop %v781
        %v783 = vmul.f32 %v782, 0.6931472
        %v784 = vmul.f32 -0.5, %v718
        %v785 = vadd.f32 %v784, 1.0
        %v786 = vmul.f32 %v785, %v718
        %v787 = vand.u32 2147483647, %v718
        %vm788 = vcmp.lt.f32.partialorder %v787, 0.0004427343
        %v789 = vsel %vm788, %v786, %v783
        %v790 = vadd.f32 %v720, 1.0
        %v791 = vlog2.pop %v790
        %v792 = vmul.f32 %v791, 0.6931472
        %v793 = vmul.f32 -0.5, %v720
        %v794 = vadd.f32 %v793, 1.0
        %v795 = vmul.f32 %v794, %v720
        %v796 = vand.u32 2147483647, %v720
        %vm797 = vcmp.lt.f32.partialorder %v796, 0.0004427343
        %v798 = vsel %vm797, %v795, %v792
        %v799 = vadd.f32 %v722, 1.0
        %v800 = vlog2.pop %v799
        %v801 = vmul.f32 %v800, 0.6931472
        %v802 = vmul.f32 -0.5, %v722
        %v803 = vadd.f32 %v802, 1.0
        %v804 = vmul.f32 %v803, %v722
        %v805 = vand.u32 2147483647, %v722
        %vm806 = vcmp.lt.f32.partialorder %v805, 0.0004427343
        %v807 = vsel %vm806, %v804, %v801
        %v808 = vadd.f32 %v724, 1.0
        %v809 = vlog2.pop %v808
        %v810 = vmul.f32 %v809, 0.6931472
        %v811 = vmul.f32 -0.5, %v724
        %v812 = vadd.f32 %v811, 1.0
        %v813 = vmul.f32 %v812, %v724
        %v814 = vand.u32 2147483647, %v724
        %vm815 = vcmp.lt.f32.partialorder %v814, 0.0004427343
        %v816 = vsel %vm815, %v813, %v810
        %v817 = vadd.f32 %v726, 1.0
        %v818 = vlog2.pop %v817
        %v819 = vmul.f32 %v818, 0.6931472
        %v820 = vmul.f32 -0.5, %v726
        %v821 = vadd.f32 %v820, 1.0
        %v822 = vmul.f32 %v821, %v726
        %v823 = vand.u32 2147483647, %v726
        %vm824 = vcmp.lt.f32.partialorder %v823, 0.0004427343
        %v825 = vsel %vm824, %v822, %v819
        %v826 = vadd.f32 %v728, 1.0
        %v827 = vlog2.pop %v826
        %v828 = vmul.f32 %v827, 0.6931472
        %v829 = vmul.f32 -0.5, %v728
        %v830 = vadd.f32 %v829, 1.0
        %v831 = vmul.f32 %v830, %v728
        %v832 = vand.u32 2147483647, %v728
        %vm833 = vcmp.lt.f32.partialorder %v832, 0.0004427343
        %v834 = vsel %vm833, %v831, %v828
        %v835 = vadd.f32 %v730, 1.0
        %v836 = vlog2.pop %v835
        %v837 = vmul.f32 %v836, 0.6931472
        %v838 = vmul.f32 -0.5, %v730
        %v839 = vadd.f32 %v838, 1.0
        %v840 = vmul.f32 %v839, %v730
        %v841 = vand.u32 2147483647, %v730
        %vm842 = vcmp.lt.f32.partialorder %v841, 0.0004427343
        %v843 = vsel %vm842, %v840, %v837
        %v844 = vadd.f32 %v732, 1.0
        %v845 = vlog2.pop %v844
        %v846 = vmul.f32 %v845, 0.6931472
        %v847 = vmul.f32 -0.5, %v732
        %v848 = vadd.f32 %v847, 1.0
        %v849 = vmul.f32 %v848, %v732
        %v850 = vand.u32 2147483647, %v732
        %vm851 = vcmp.lt.f32.partialorder %v850, 0.0004427343
        %v852 = vsel %vm851, %v849, %v846
        %v853 = vadd.f32 %v734, 1.0
        %v854 = vlog2.pop %v853
        %v855 = vmul.f32 %v854, 0.6931472
        %v856 = vmul.f32 -0.5, %v734
        %v857 = vadd.f32 %v856, 1.0
        %v858 = vmul.f32 %v857, %v734
        %v859 = vand.u32 2147483647, %v734
        %vm860 = vcmp.lt.f32.partialorder %v859, 0.0004427343
        %v861 = vsel %vm860, %v858, %v855
        %v862 = vadd.f32 %v736, 1.0
        %v863 = vlog2.pop %v862
        %v864 = vmul.f32 %v863, 0.6931472
        %v865 = vmul.f32 -0.5, %v736
        %v866 = vadd.f32 %v865, 1.0
        %v867 = vmul.f32 %v866, %v736
        %v868 = vand.u32 2147483647, %v736
        %vm869 = vcmp.lt.f32.partialorder %v868, 0.0004427343
        %v870 = vsel %vm869, %v867, %v864
        %v871 = vadd.f32 %v738, 1.0
        %v872 = vlog2.pop %v871
        %v873 = vmul.f32 %v872, 0.6931472
        %v874 = vmul.f32 -0.5, %v738
        %v875 = vadd.f32 %v874, 1.0
        %v876 = vmul.f32 %v875, %v738
        %v877 = vand.u32 2147483647, %v738
        %vm878 = vcmp.lt.f32.partialorder %v877, 0.0004427343
        %v879 = vsel %vm878, %v876, %v873
        %v880 = vadd.f32 %v740, 1.0
        %v881 = vlog2.pop %v880
        %v882 = vmul.f32 %v881, 0.6931472
        %v883 = vmul.f32 -0.5, %v740
        %v884 = vadd.f32 %v883, 1.0
        %v885 = vmul.f32 %v884, %v740
        %v886 = vand.u32 2147483647, %v740
        %vm887 = vcmp.lt.f32.partialorder %v886, 0.0004427343
        %v888 = vsel %vm887, %v885, %v882
        %v889 = vadd.f32 %v742, 1.0
        %v890 = vlog2.pop %v889
        %v891 = vmul.f32 %v890, 0.6931472
        %v892 = vmul.f32 -0.5, %v742
        %v893 = vadd.f32 %v892, 1.0
        %v894 = vmul.f32 %v893, %v742
        %v895 = vand.u32 2147483647, %v742
        %vm896 = vcmp.lt.f32.partialorder %v895, 0.0004427343
        %v897 = vsel %vm896, %v894, %v891
        %v898 = vadd.f32 %v744, 1.0
        %v899 = vlog2.pop %v898
        %v900 = vmul.f32 %v899, 0.6931472
        %v901 = vmul.f32 -0.5, %v744
        %v902 = vadd.f32 %v901, 1.0
        %v903 = vmul.f32 %v902, %v744
        %v904 = vand.u32 2147483647, %v744
        %vm905 = vcmp.lt.f32.partialorder %v904, 0.0004427343
        %v906 = vsel %vm905, %v903, %v900
        %v907 = vadd.f32 %v746, 1.0
        %v908 = vlog2.pop %v907
        %v909 = vmul.f32 %v908, 0.6931472
        %v910 = vmul.f32 -0.5, %v746
        %v911 = vadd.f32 %v910, 1.0
        %v912 = vmul.f32 %v911, %v746
        %v913 = vand.u32 2147483647, %v746
        %vm914 = vcmp.lt.f32.partialorder %v913, 0.0004427343
        %v915 = vsel %vm914, %v912, %v909
        %v916 = vadd.f32 %v748, 1.0
        %v917 = vlog2.pop %v916
        %v918 = vmul.f32 %v917, 0.6931472
        %v919 = vmul.f32 -0.5, %v748
        %v920 = vadd.f32 %v919, 1.0
        %v921 = vmul.f32 %v920, %v748
        %v922 = vand.u32 2147483647, %v748
        %vm923 = vcmp.lt.f32.partialorder %v922, 0.0004427343
        %v924 = vsel %vm923, %v921, %v918
        %v925 = vadd.f32 %v750, 1.0
        %v926 = vlog2.pop %v925
        %v927 = vmul.f32 %v926, 0.6931472
        %v928 = vmul.f32 -0.5, %v750
        %v929 = vadd.f32 %v928, 1.0
        %v930 = vmul.f32 %v929, %v750
        %v931 = vand.u32 2147483647, %v750
        %vm932 = vcmp.lt.f32.partialorder %v931, 0.0004427343
        %v933 = vsel %vm932, %v930, %v927
        %v934 = vadd.f32 %v752, 1.0
        %v935 = vlog2.pop %v934
        %v936 = vmul.f32 %v935, 0.6931472
        %v937 = vmul.f32 -0.5, %v752
        %v938 = vadd.f32 %v937, 1.0
        %v939 = vmul.f32 %v938, %v752
        %v940 = vand.u32 2147483647, %v752
        %vm941 = vcmp.lt.f32.partialorder %v940, 0.0004427343
        %v942 = vsel %vm941, %v939, %v936
        %v943 = vadd.f32 %v754, 1.0
        %v944 = vlog2.pop %v943
        %v945 = vmul.f32 %v944, 0.6931472
        %v946 = vmul.f32 -0.5, %v754
        %v947 = vadd.f32 %v946, 1.0
        %v948 = vmul.f32 %v947, %v754
        %v949 = vand.u32 2147483647, %v754
        %vm950 = vcmp.lt.f32.partialorder %v949, 0.0004427343
        %v951 = vsel %vm950, %v948, %v945
        %v952 = vadd.f32 %v756, 1.0
        %v953 = vlog2.pop %v952
        %v954 = vmul.f32 %v953, 0.6931472
        %v955 = vmul.f32 -0.5, %v756
        %v956 = vadd.f32 %v955, 1.0
        %v957 = vmul.f32 %v956, %v756
        %v958 = vand.u32 2147483647, %v756
        %vm959 = vcmp.lt.f32.partialorder %v958, 0.0004427343
        %v960 = vsel %vm959, %v957, %v954
        %v961 = vadd.f32 %v758, 1.0
        %v962 = vlog2.pop %v961
        %v963 = vmul.f32 %v962, 0.6931472
        %v964 = vmul.f32 -0.5, %v758
        %v965 = vadd.f32 %v964, 1.0
        %v966 = vmul.f32 %v965, %v758
        %v967 = vand.u32 2147483647, %v758
        %vm968 = vcmp.lt.f32.partialorder %v967, 0.0004427343
        %v969 = vsel %vm968, %v966, %v963
        %v970 = vadd.f32 %v760, 1.0
        %v971 = vlog2.pop %v970
        %v972 = vmul.f32 %v971, 0.6931472
        %v973 = vmul.f32 -0.5, %v760
        %v974 = vadd.f32 %v973, 1.0
        %v975 = vmul.f32 %v974, %v760
        %v976 = vand.u32 2147483647, %v760
        %vm977 = vcmp.lt.f32.partialorder %v976, 0.0004427343
        %v978 = vsel %vm977, %v975, %v972
        %v979 = vadd.f32 %v762, 1.0
        %v980 = vlog2.pop %v979
        %v981 = vmul.f32 %v980, 0.6931472
        %v982 = vmul.f32 -0.5, %v762
        %v983 = vadd.f32 %v982, 1.0
        %v984 = vmul.f32 %v983, %v762
        %v985 = vand.u32 2147483647, %v762
        %vm986 = vcmp.lt.f32.partialorder %v985, 0.0004427343
        %v987 = vsel %vm986, %v984, %v981
        %v988 = vadd.f32 %v764, 1.0
        %v989 = vlog2.pop %v988
        %v990 = vmul.f32 %v989, 0.6931472
        %v991 = vmul.f32 -0.5, %v764
        %v992 = vadd.f32 %v991, 1.0
        %v993 = vmul.f32 %v992, %v764
        %v994 = vand.u32 2147483647, %v764
        %vm995 = vcmp.lt.f32.partialorder %v994, 0.0004427343
        %v996 = vsel %vm995, %v993, %v990
        %v997 = vadd.f32 %v766, 1.0
        %v998 = vlog2.pop %v997
        %v999 = vmul.f32 %v998, 0.6931472
        %v1000 = vmul.f32 -0.5, %v766
        %v1001 = vadd.f32 %v1000, 1.0
        %v1002 = vmul.f32 %v1001, %v766
        %v1003 = vand.u32 2147483647, %v766
        %vm1004 = vcmp.lt.f32.partialorder %v1003, 0.0004427343
        %v1005 = vsel %vm1004, %v1002, %v999
        %v1006 = vadd.f32 %v768, 1.0
        %v1007 = vlog2.pop %v1006
        %v1008 = vmul.f32 %v1007, 0.6931472
        %v1009 = vmul.f32 -0.5, %v768
        %v1010 = vadd.f32 %v1009, 1.0
        %v1011 = vmul.f32 %v1010, %v768
        %v1012 = vand.u32 2147483647, %v768
        %vm1013 = vcmp.lt.f32.partialorder %v1012, 0.0004427343
        %v1014 = vsel %vm1013, %v1011, %v1008
        %v1015 = vadd.f32 %v770, 1.0
        %v1016 = vlog2.pop %v1015
        %v1017 = vmul.f32 %v1016, 0.6931472
        %v1018 = vmul.f32 -0.5, %v770
        %v1019 = vadd.f32 %v1018, 1.0
        %v1020 = vmul.f32 %v1019, %v770
        %v1021 = vand.u32 2147483647, %v770
        %vm1022 = vcmp.lt.f32.partialorder %v1021, 0.0004427343
        %v1023 = vsel %vm1022, %v1020, %v1017
        %v1024 = vadd.f32 %v772, 1.0
        %v1025 = vlog2.pop %v1024
        %v1026 = vmul.f32 %v1025, 0.6931472
        %v1027 = vmul.f32 -0.5, %v772
        %v1028 = vadd.f32 %v1027, 1.0
        %v1029 = vmul.f32 %v1028, %v772
        %v1030 = vand.u32 2147483647, %v772
        %vm1031 = vcmp.lt.f32.partialorder %v1030, 0.0004427343
        %v1032 = vsel %vm1031, %v1029, %v1026
        %v1033 = vadd.f32 %v774, 1.0
        %v1034 = vlog2.pop %v1033
        %v1035 = vmul.f32 %v1034, 0.6931472
        %v1036 = vmul.f32 -0.5, %v774
        %v1037 = vadd.f32 %v1036, 1.0
        %v1038 = vmul.f32 %v1037, %v774
        %v1039 = vand.u32 2147483647, %v774
        %vm1040 = vcmp.lt.f32.partialorder %v1039, 0.0004427343
        %v1041 = vsel %vm1040, %v1038, %v1035
        %v1042 = vadd.f32 %v776, 1.0
        %v1043 = vlog2.pop %v1042
        %v1044 = vmul.f32 %v1043, 0.6931472
        %v1045 = vmul.f32 -0.5, %v776
        %v1046 = vadd.f32 %v1045, 1.0
        %v1047 = vmul.f32 %v1046, %v776
        %v1048 = vand.u32 2147483647, %v776
        %vm1049 = vcmp.lt.f32.partialorder %v1048, 0.0004427343
        %v1050 = vsel %vm1049, %v1047, %v1044
        %v1051 = vadd.f32 %v778, 1.0
        %v1052 = vlog2.pop %v1051
        %v1053 = vmul.f32 %v1052, 0.6931472
        %v1054 = vmul.f32 -0.5, %v778
        %v1055 = vadd.f32 %v1054, 1.0
        %v1056 = vmul.f32 %v1055, %v778
        %v1057 = vand.u32 2147483647, %v778
        %vm1058 = vcmp.lt.f32.partialorder %v1057, 0.0004427343
        %v1059 = vsel %vm1058, %v1056, %v1053
        %v1060 = vadd.f32 %v780, 1.0
        %v1061 = vlog2.pop %v1060
        %v1062 = vmul.f32 %v1061, 0.6931472
        %v1063 = vmul.f32 -0.5, %v780
        %v1064 = vadd.f32 %v1063, 1.0
        %v1065 = vmul.f32 %v1064, %v780
        %v1066 = vand.u32 2147483647, %v780
        %vm1067 = vcmp.lt.f32.partialorder %v1066, 0.0004427343
        %v1068 = vsel %vm1067, %v1065, %v1062
        %v1069 = vsub.f32 %v621, %v789
        %v1070 = vsub.f32 %v622, %v798
        %v1071 = vsub.f32 %v623, %v807
        %v1072 = vsub.f32 %v624, %v816
        %v1073 = vsub.f32 %v625, %v825
        %v1074 = vsub.f32 %v626, %v834
        %v1075 = vsub.f32 %v627, %v843
        %v1076 = vsub.f32 %v628, %v852
        %v1077 = vsub.f32 %v629, %v861
        %v1078 = vsub.f32 %v630, %v870
        %v1079 = vsub.f32 %v631, %v879
        %v1080 = vsub.f32 %v632, %v888
        %v1081 = vsub.f32 %v633, %v897
        %v1082 = vsub.f32 %v634, %v906
        %v1083 = vsub.f32 %v635, %v915
        %v1084 = vsub.f32 %v636, %v924
        %v1085 = vsub.f32 %v637, %v933
        %v1086 = vsub.f32 %v638, %v942
        %v1087 = vsub.f32 %v639, %v951
        %v1088 = vsub.f32 %v640, %v960
        %v1089 = vsub.f32 %v641, %v969
        %v1090 = vsub.f32 %v642, %v978
        %v1091 = vsub.f32 %v643, %v987
        %v1092 = vsub.f32 %v644, %v996
        %v1093 = vsub.f32 %v645, %v1005
        %v1094 = vsub.f32 %v646, %v1014
        %v1095 = vsub.f32 %v647, %v1023
        %v1096 = vsub.f32 %v648, %v1032
        %v1097 = vsub.f32 %v649, %v1041
        %v1098 = vsub.f32 %v650, %v1050
        %v1099 = vsub.f32 %v651, %v1059
        %v1100 = vsub.f32 %v652, %v1068
        %v1101 = vadd.f32 %v1069, %v1070
        %v1102 = vadd.f32 %v1101, %v1071
        %v1103 = vadd.f32 %v1102, %v1072
        %1104 = vadd.xlane.f32.xlu0 %v1103
        %v1105 = vpop.xlane.xlu0 %1104
        %v1106 = vadd.f32 %v1073, %v1074
        %v1107 = vadd.f32 %v1106, %v1075
        %v1108 = vadd.f32 %v1107, %v1076
        %1109 = vadd.xlane.f32.xlu0 %v1108
        %v1110 = vpop.xlane.xlu0 %1109
        %v1111 = vadd.f32 %v1077, %v1078
        %v1112 = vadd.f32 %v1111, %v1079
        %v1113 = vadd.f32 %v1112, %v1080
        %1114 = vadd.xlane.f32.xlu0 %v1113
        %v1115 = vpop.xlane.xlu0 %1114
        %v1116 = vadd.f32 %v1081, %v1082
        %v1117 = vadd.f32 %v1116, %v1083
        %v1118 = vadd.f32 %v1117, %v1084
        %1119 = vadd.xlane.f32.xlu0 %v1118
        %v1120 = vpop.xlane.xlu0 %1119
        %v1121 = vadd.f32 %v1085, %v1086
        %v1122 = vadd.f32 %v1121, %v1087
        %v1123 = vadd.f32 %v1122, %v1088
        %1124 = vadd.xlane.f32.xlu0 %v1123
        %v1125 = vpop.xlane.xlu0 %1124
        %v1126 = vadd.f32 %v1089, %v1090
        %v1127 = vadd.f32 %v1126, %v1091
        %v1128 = vadd.f32 %v1127, %v1092
        %1129 = vadd.xlane.f32.xlu0 %v1128
        %v1130 = vpop.xlane.xlu0 %1129
        %v1131 = vadd.f32 %v1093, %v1094
        %v1132 = vadd.f32 %v1131, %v1095
        %v1133 = vadd.f32 %v1132, %v1096
        %1134 = vadd.xlane.f32.xlu0 %v1133
        %v1135 = vpop.xlane.xlu0 %1134
        %v1136 = vadd.f32 %v1097, %v1098
        %v1137 = vadd.f32 %v1136, %v1099
        %v1138 = vadd.f32 %v1137, %v1100
        %1139 = vadd.xlane.f32.xlu0 %v1138
        %v1140 = vpop.xlane.xlu0 %1139
        %v1141 = vld [vmem:[%s271] sm:$0xff]
        %v1143 = vlaneseq
        %v1144 = vshrl.u32 %v1143, 7
        %v1145 = vsub.s32 0, %v1144
        %v1146 = vrot.slane %v281, %v1145
        %1148 = vbcast.lane.b32.xlu0 %v1146, 256
        %v1149 = vpop.permute.xlu0 %1148
        %v1150 = vlaneseq
        %v1151 = vshrl.u32 %v1150, 7
        %v1152 = vsub.s32 1, %v1151
        %v1153 = vrot.slane %v281, %v1152
        %1155 = vbcast.lane.b32.xlu0 %v1153, 256
        %v1156 = vpop.permute.xlu0 %1155
        %v1157 = vlaneseq
        %v1158 = vshrl.u32 %v1157, 7
        %v1159 = vsub.s32 2, %v1158
        %v1160 = vrot.slane %v281, %v1159
        %1162 = vbcast.lane.b32.xlu0 %v1160, 256
        %v1163 = vpop.permute.xlu0 %1162
        %v1164 = vlaneseq
        %v1165 = vshrl.u32 %v1164, 7
        %v1166 = vsub.s32 3, %v1165
        %v1167 = vrot.slane %v281, %v1166
        %1169 = vbcast.lane.b32.xlu0 %v1167, 256
        %v1170 = vpop.permute.xlu0 %1169
        %v1171 = vlaneseq
        %v1172 = vshrl.u32 %v1171, 7
        %v1173 = vsub.s32 4, %v1172
        %v1174 = vrot.slane %v281, %v1173
        %1176 = vbcast.lane.b32.xlu0 %v1174, 256
        %v1177 = vpop.permute.xlu0 %1176
        %v1178 = vlaneseq
        %v1179 = vshrl.u32 %v1178, 7
        %v1180 = vsub.s32 5, %v1179
        %v1181 = vrot.slane %v281, %v1180
        %1183 = vbcast.lane.b32.xlu0 %v1181, 256
        %v1184 = vpop.permute.xlu0 %1183
        %v1185 = vlaneseq
        %v1186 = vshrl.u32 %v1185, 7
        %v1187 = vsub.s32 6, %v1186
        %v1188 = vrot.slane %v281, %v1187
        %1190 = vbcast.lane.b32.xlu0 %v1188, 256
        %v1191 = vpop.permute.xlu0 %1190
        %v1192 = vlaneseq
        %v1193 = vshrl.u32 %v1192, 7
        %v1194 = vsub.s32 7, %v1193
        %v1195 = vrot.slane %v281, %v1194
        %1197 = vbcast.lane.b32.xlu0 %v1195, 256
        %v1198 = vpop.permute.xlu0 %1197
        %v1207 = vmul.f32 %v1105, %v1149
        %v1208 = vmul.f32 %v1110, %v1156
        %v1209 = vmul.f32 %v1115, %v1163
        %v1210 = vmul.f32 %v1120, %v1170
        %v1211 = vmul.f32 %v1125, %v1177
        %v1212 = vmul.f32 %v1130, %v1184
        %v1213 = vmul.f32 %v1135, %v1191
        %v1214 = vmul.f32 %v1140, %v1198
        %1223 = vset.pattern.permute.xlu0 0
        %1224 = vperm.xlu0 %1223, %v1207
        %v1225 = vpop.permute.xlu0 %1224
        %1226 = vset.pattern.permute.xlu0 0
        %1227 = vperm.xlu0 %1226, %v1208
        %v1228 = vpop.permute.xlu0 %1227
        %1229 = vset.pattern.permute.xlu0 0
        %1230 = vperm.xlu0 %1229, %v1209
        %v1231 = vpop.permute.xlu0 %1230
        %1232 = vset.pattern.permute.xlu0 0
        %1233 = vperm.xlu0 %1232, %v1210
        %v1234 = vpop.permute.xlu0 %1233
        %1235 = vset.pattern.permute.xlu0 0
        %1236 = vperm.xlu0 %1235, %v1211
        %v1237 = vpop.permute.xlu0 %1236
        %1238 = vset.pattern.permute.xlu0 0
        %1239 = vperm.xlu0 %1238, %v1212
        %v1240 = vpop.permute.xlu0 %1239
        %1241 = vset.pattern.permute.xlu0 0
        %1242 = vperm.xlu0 %1241, %v1213
        %v1243 = vpop.permute.xlu0 %1242
        %1244 = vset.pattern.permute.xlu0 0
        %1245 = vperm.xlu0 %1244, %v1214
        %v1246 = vpop.permute.xlu0 %1245
        %v1247 = vlaneseq
        %v1248 = vand.u32 %v1247, 127
        %v1249 = vlaneseq
        %v1250 = vshrl.u32 %v1249, 7
        %v1251 = vsub.s32 %v1248, %v1250
        %v1252 = vrot.slane %v1225, %v1251
        %v1253 = vlaneseq
        %v1254 = vshrl.u32 %v1253, 7
        %v1255 = vsub.s32 %v1248, %v1254
        %v1256 = vrot.slane %v1228, %v1255
        %v1257 = vlaneseq
        %v1258 = vshrl.u32 %v1257, 7
        %v1259 = vsub.s32 %v1248, %v1258
        %v1260 = vrot.slane %v1231, %v1259
        %v1261 = vlaneseq
        %v1262 = vshrl.u32 %v1261, 7
        %v1263 = vsub.s32 %v1248, %v1262
        %v1264 = vrot.slane %v1234, %v1263
        %v1265 = vlaneseq
        %v1266 = vshrl.u32 %v1265, 7
        %v1267 = vsub.s32 %v1248, %v1266
        %v1268 = vrot.slane %v1237, %v1267
        %v1269 = vlaneseq
        %v1270 = vshrl.u32 %v1269, 7
        %v1271 = vsub.s32 %v1248, %v1270
        %v1272 = vrot.slane %v1240, %v1271
        %v1273 = vlaneseq
        %v1274 = vshrl.u32 %v1273, 7
        %v1275 = vsub.s32 %v1248, %v1274
        %v1276 = vrot.slane %v1243, %v1275
        %v1277 = vlaneseq
        %v1278 = vshrl.u32 %v1277, 7
        %v1279 = vsub.s32 %v1248, %v1278
        %v1280 = vrot.slane %v1246, %v1279
        %vm1281 = vcmask 1041409
        %v1282 = vsel %vm1281, %v1256, %v1252
        %vm1283 = vcmask 1042434
        %v1284 = vsel %vm1283, %v1260, %v1282
        %vm1285 = vcmask 1043459
        %v1286 = vsel %vm1285, %v1264, %v1284
        %vm1287 = vcmask 1044484
        %v1288 = vsel %vm1287, %v1268, %v1286
        %vm1289 = vcmask 1045509
        %v1290 = vsel %vm1289, %v1272, %v1288
        %vm1291 = vcmask 1046534
        %v1292 = vsel %vm1291, %v1276, %v1290
        %vm1293 = vcmask 1047559
        %v1294 = vsel %vm1293, %v1280, %v1292
        %vm1296 = vcmask 64512
        %v1297 = vsel %vm1296, %v1294, 0.0
        %1298 = vadd.xlane.f32.xlu0 %v1297
        %v1299 = vpop.xlane.xlu0 %1298
        %v1300 = vrot.slane %v1299, 4
        %v1301 = vadd.f32 %v1299, %v1300
        %v1302 = vrot.slane %v1301, 2
        %v1303 = vadd.f32 %v1301, %v1302
        %v1304 = vrot.slane %v1303, 1
        %v1305 = vadd.f32 %v1303, %v1304
        %s1306 = vtos %v1305
        %v1307 = vstv %s1306
        %v1308 = vadd.f32 %v1141, %v1307
        %1309 = vst [vmem:[%s271] sm:$0xff] %v1308
        %p1310 = scmp.lt.s32.totalorder %s23, 1
        %s1311 = scalar_select %p1310, %s23, 1
        %s1312 = smul.addr %s1311, 8
        %s1313 = scalar_lea.vmem %s3, %s1312
        %p1314 = scmp.lt.s32.totalorder %s23, 1
        %s1315 = scalar_select %p1314, %s23, 1
        %s1316 = smul.addr %s1315, 8
        %s1317 = scalar_lea.vmem %s4, %s1316
        // Predicated region
        $region41: #{bpr_loss.1} parent=31 // pred_check
          %p1318 = pneg %p129
        $region42: #{bpr_loss.1} parent=31 // pred_check_branch
          %1320 = sbr.rel (%p1318) target = $region44
        $region43: #{bpr_loss.1} parent=31 // pred_region
          _
        $region44: #{bpr_loss.1} parent=31 // pred_fallthru
          _
        // Predicated region
        $region45: #{bpr_loss.1} parent=31 // pred_check
          %p1321 = pneg %p155
        $region46: #{bpr_loss.1} parent=31 // pred_check_branch
          %1323 = sbr.rel (%p1321) target = $region48
        $region47: #{bpr_loss.1} parent=31 // pred_region
          _
        $region48: #{bpr_loss.1} parent=31 // pred_fallthru
          _
      $region32: #{bpr_loss.1} parent=5 // pred_fallthru
        _
      %p1324 = scmp.le.s32.totalorder 2, %s14
      // Predicated region
      $region49: #{bpr_loss.1} parent=5 // pred_check
        %p1325 = pneg %p1324
      $region50: #{bpr_loss.1} parent=5 // pred_check_branch
        %1327 = sbr.rel (%p1325) target = $region52
      $region51: #{bpr_loss.1} parent=5 // pred_region
        %s1328 = ssub.s32 %s14, 2
        // Predicated region
        $region53: #{bpr_loss.1} parent=51 // pred_check
          %p1329 = pneg %p135
        $region54: #{bpr_loss.1} parent=51 // pred_check_branch
          %1331 = sbr.rel (%p1329) target = $region56
        $region55: #{bpr_loss.1} parent=51 // pred_region
          %p1332 = scmp.lt.s32.totalorder %s25, 1
          %s1333 = scalar_select %p1332, %s25, 1
          %s1334 = smul.addr %s1333, 8
          %s1335 = scalar_lea.vmem %s3, %s1334
        $region56: #{bpr_loss.1} parent=51 // pred_fallthru
          _
        // Predicated region
        $region57: #{bpr_loss.1} parent=51 // pred_check
          %p1336 = pneg %p161
        $region58: #{bpr_loss.1} parent=51 // pred_check_branch
          %1338 = sbr.rel (%p1336) target = $region60
        $region59: #{bpr_loss.1} parent=51 // pred_region
          %p1339 = scmp.lt.s32.totalorder %s25, 1
          %s1340 = scalar_select %p1339, %s25, 1
          %s1341 = smul.addr %s1340, 8
          %s1342 = scalar_lea.vmem %s4, %s1341
        $region60: #{bpr_loss.1} parent=51 // pred_fallthru
          _
      $region52: #{bpr_loss.1} parent=5 // pred_fallthru
        _
    $region6: #{bpr_loss.1} parent=1 // loop_footer
      %s18 = sadd.s32 1, %s14
    $region7: #{bpr_loss.1} parent=1 // loop_footer_branch
      %13 = sbr.rel target = $region3
    $region8: #{bpr_loss.1} parent=1 // loop_exit
      _
    %1343 = vsyncpa [#allocation3], 1
    %s1344 = scalar_lea.sflag [#allocation3], 1
    %1345 = vsyncpa %s1344, 1

</llo_original>
